<compile_context>
chip_gen: v7x
topology: tpu7x:2x2x1
jax: 0.10.0
libtpu: 0.0.40
codegen_flags: <defaults>
</compile_context>

<pallas_src>
import functools

import jax
import jax.numpy as jnp
from jax.experimental import pallas as pl
from jax.experimental.pallas import tpu as pltpu


def _round_up(n, m):
    return (n + m - 1) // m * m


def _cdiv(a, b):
    return -(-a // b)


def _vmem_capacity_bytes():
    """Per-TensorCore VMEM capacity; conservative 64 MiB fallback (v7x size),
    so a failed query can never over-commit physical VMEM on any generation."""
    try:
        info = pltpu.get_tpu_info()
        cap = int(getattr(info, "vmem_capacity_bytes", 0))
        if cap > 0:
            return cap
    except Exception:
        pass
    return 64 * 1024 * 1024


def mlpfan_kernel(x_ref,
                  w_m0_ref, w_m1_ref, w_f1_ref, w_f2_ref,
                  p_ref,
                  o_ref,
                  *, d_true, eps, nsub):
    """One row-tile: 4 GEMMs + ReLU + residual + LayerNorm, in row sub-blocks."""
    compute_dtype = w_m0_ref.dtype
    rt, dp = x_ref.shape
    sub = rt // nsub

    # Packed per-channel vectors (f32): rows 0..3 biases, 4 gamma, 5 beta.
    b_m0 = p_ref[0:1, :]
    b_m1 = p_ref[1:2, :]
    b_f1 = p_ref[2:3, :]
    b_f2 = p_ref[3:4, :]
    gamma = p_ref[4:5, :]
    beta = p_ref[5:6, :]

    col_mask = None
    if d_true != dp:  # static: only when the embedding dim was zero-padded
        col = jax.lax.broadcasted_iota(jnp.int32, (1, dp), 1)
        col_mask = col < d_true

    inv_d = jnp.float32(1.0 / d_true)

    # Static sub-block loop: the GEMM pushes of sub-block j+1 overlap the MXU
    # drain + VPU epilogue of sub-block j, and live f32 intermediates shrink.
    for j in range(nsub):
        rows = pl.ds(j * sub, sub)
        x = x_ref[rows, :].astype(compute_dtype)

        # MLPlist: two plain Linear layers (no activation between them).
        h = jnp.dot(x, w_m0_ref[...], preferred_element_type=jnp.float32) + b_m0
        h = jnp.dot(h.astype(compute_dtype), w_m1_ref[...],
                    preferred_element_type=jnp.float32) + b_m1

        # Feedforward_2(relu(Feedforward_1(h)))
        f = jnp.dot(h.astype(compute_dtype), w_f1_ref[...],
                    preferred_element_type=jnp.float32) + b_f1
        f = jnp.maximum(f, 0.0)
        f = jnp.dot(f.astype(compute_dtype), w_f2_ref[...],
                    preferred_element_type=jnp.float32) + b_f2

        # Residual + LayerNorm over the true last dim (eps=1e-5, population
        # var).  Two-pass stats: center first, then sum of squares; padded
        # columns (which hold -mean after centering) are masked back to zero.
        y = f + h
        mean = jnp.sum(y, axis=-1, keepdims=True) * inv_d
        yc = y - mean
        if col_mask is not None:
            yc = jnp.where(col_mask, yc, 0.0)
        var = jnp.sum(yc * yc, axis=-1, keepdims=True) * inv_d
        y_hat = yc * jax.lax.rsqrt(var + eps)
        o_ref[rows, :] = (y_hat * gamma + beta).astype(o_ref.dtype)


def mlpfan_block(x, params, *, row_tile=None, compute_dtype=jnp.bfloat16):
    """x: (batch, seq, D) float32.  params: dict of weights (see init_params)."""
    B, S, D = x.shape
    N = B * S

    # Lane-dense padded embedding dim (no-op when D is a multiple of 128).
    Dp = _round_up(max(D, 128), 128)
    wbytes = jnp.dtype(compute_dtype).itemsize
    x_in_dtype = jnp.float32 if Dp == D else compute_dtype
    xbytes = jnp.dtype(x_in_dtype).itemsize

    # --- VMEM budget -> row tile --------------------------------------------
    cap = _vmem_capacity_bytes()
    budget = int(0.80 * cap)
    fixed = 4 * Dp * Dp * wbytes + 8 * Dp * 4   # single-buffered weights + pvec
    if fixed > budget:
        # TODO(synk): stream weight tiles over an extra "arbitrary" grid axis
        # with a VMEM f32 accumulator once 4*Dp^2 weights no longer fit VMEM
        # (roughly D > ~2.3k on v7x, > ~3.5k on v5e/v6e).
        raise NotImplementedError(
            f"embedding_dim={D}: weight set ({fixed} B) exceeds VMEM budget "
            f"({budget} B); weight streaming not implemented")

    # Per-row VMEM: x (2 bufs) + f32 out (2 bufs) + ~4 live f32 temporaries.
    per_row = Dp * (2 * xbytes + 2 * 4 + 4 * 4)
    rt_cap = 1024 if row_tile is None else max(16, _round_up(int(row_tile), 16))
    rt = max(16, min(rt_cap, (budget - fixed) // per_row // 16 * 16))
    rt = min(rt, _round_up(N, 16))
    if N >= 256:                           # keep both TensorCores busy (megacore)
        rt = min(rt, _round_up(_cdiv(N, 2), 16))
    ntiles = _cdiv(N, rt)
    rt = _round_up(_cdiv(N, ntiles), 16)   # rebalance -> minimal row padding
    Np = rt * ntiles
    nsub = 2 if (rt % 32 == 0 and rt >= 256) else 1

    # --- Operand prep (skip HBM round trips when no padding is needed) -------
    x2 = jnp.asarray(x, jnp.float32).reshape(N, D)
    if Np == N and Dp == D:
        x_in = x2                                   # no copy; bf16 cast in-kernel
    elif Dp == D:
        x_in = jnp.pad(x2, ((0, Np - N), (0, 0)))   # row pad only, stays f32
    else:
        x_in = jnp.pad(x2, ((0, Np - N), (0, Dp - D))).astype(compute_dtype)

    def prep_w(w):  # torch (out, in) -> (in, out), zero-padded, compute dtype
        w = jnp.asarray(w, jnp.float32).T
        if Dp != D:
            w = jnp.pad(w, ((0, Dp - D), (0, Dp - D)))
        return w.astype(compute_dtype)

    def prep_v(v):
        v = jnp.asarray(v, jnp.float32)
        return jnp.pad(v, (0, Dp - D)) if Dp != D else v

    w_m0 = prep_w(params["mlp0_w"])
    w_m1 = prep_w(params["mlp1_w"])
    w_f1 = prep_w(params["ff1_w"])
    w_f2 = prep_w(params["ff2_w"])

    # Biases + LN affine packed into one (8, Dp) f32 block (rows 6,7 unused).
    pvec = jnp.stack([prep_v(params["mlp0_b"]), prep_v(params["mlp1_b"]),
                      prep_v(params["ff1_b"]), prep_v(params["ff2_b"]),
                      prep_v(params["ln_g"]), prep_v(params["ln_b"])])
    pvec = jnp.pad(pvec, ((0, 8 - pvec.shape[0]), (0, 0)))

    # --- VMEM limit: real requirement + slack, clamped per generation --------
    needed = (fixed
              + 2 * rt * Dp * xbytes          # x double-buffer
              + 2 * rt * Dp * 4               # f32 out double-buffer
              + 4 * (rt // nsub) * Dp * 4     # live f32 intermediates per sub-block
              + (2 << 20))                    # Mosaic internal scratch slack
    vmem_limit = min(int(0.90 * cap), max(int(1.5 * needed), 32 << 20))

    cost = pl.CostEstimate(
        flops=int(8 * Np * Dp * Dp),                  # four (rt,Dp)@(Dp,Dp) GEMMs
        transcendentals=int(Np),                      # one rsqrt per row
        bytes_accessed=int(Np * Dp * (xbytes + 4)     # x in + f32 out
                           + 4 * Dp * Dp * wbytes     # weights
                           + 8 * Dp * 4),             # packed bias/LN block
    )

    # Grid-invariant operands: constant index_map -> single buffer is enough.
    w_spec = pl.BlockSpec((Dp, Dp), lambda i: (0, 0),
                          pipeline_mode=pl.Buffered(1))
    p_spec = pl.BlockSpec((8, Dp), lambda i: (0, 0),
                          pipeline_mode=pl.Buffered(1))

    out2 = pl.pallas_call(
        functools.partial(mlpfan_kernel, d_true=D, eps=1e-5, nsub=nsub),
        out_shape=jax.ShapeDtypeStruct((Np, Dp), jnp.float32),
        grid_spec=pltpu.PrefetchScalarGridSpec(
            num_scalar_prefetch=0,
            grid=(ntiles,),
            in_specs=[
                pl.BlockSpec((rt, Dp), lambda i: (i, 0)),   # x row tile
                w_spec, w_spec, w_spec, w_spec,             # 4 DxD weights
                p_spec,                                     # biases + LN affine
            ],
            out_specs=pl.BlockSpec((rt, Dp), lambda i: (i, 0)),
        ),
        compiler_params=pltpu.CompilerParams(
            dimension_semantics=("parallel",),
            vmem_limit_bytes=vmem_limit,
        ),
        cost_estimate=cost,
    )(x_in, w_m0, w_m1, w_f1, w_f2, pvec)

    out = out2 if (Np == N and Dp == D) else out2[:N, :D]
    return out.reshape(B, S, D)


def init_params(key, D):
    """Deterministic synthetic init (PyTorch-style scales, not a checkpoint)."""
    ks = jax.random.split(key, 8)
    bound = 1.0 / jnp.sqrt(D)

    def lin(kw, kb):
        w = jax.random.uniform(kw, (D, D), jnp.float32, -bound, bound)  # (out, in)
        b = jax.random.uniform(kb, (D,), jnp.float32, -bound, bound)
        return w, b

    mlp0_w, mlp0_b = lin(ks[0], ks[1])
    mlp1_w, mlp1_b = lin(ks[2], ks[3])
    ff1_w, ff1_b = lin(ks[4], ks[5])
    ff2_w, ff2_b = lin(ks[6], ks[7])
    return dict(
        mlp0_w=mlp0_w, mlp0_b=mlp0_b,
        mlp1_w=mlp1_w, mlp1_b=mlp1_b,
        ff1_w=ff1_w, ff1_b=ff1_b,
        ff2_w=ff2_w, ff2_b=ff2_b,
        ln_g=jnp.ones((D,), jnp.float32),   # nn.LayerNorm default init
        ln_b=jnp.zeros((D,), jnp.float32),
    )


def _layernorm(y, g, b, eps=1e-5):
    mean = jnp.mean(y, axis=-1, keepdims=True)
    var = jnp.mean((y - mean) ** 2, axis=-1, keepdims=True)
    return (y - mean) / jnp.sqrt(var + eps) * g + b


def mlpfan_ref(x, p):
    """Pure-JAX f32 reference matching the PyTorch forward."""
    def lin(v, w, b):
        return v @ w.T + b

    h = lin(lin(x, p["mlp0_w"], p["mlp0_b"]), p["mlp1_w"], p["mlp1_b"])
    f = lin(jax.nn.relu(lin(h, p["ff1_w"], p["ff1_b"])), p["ff2_w"], p["ff2_b"])
    return _layernorm(f + h, p["ln_g"], p["ln_b"])


def mlpfan_ref_matched(x, p):
    """Reference with the same bf16 operand rounding as the kernel (f32 accum)."""
    bf = lambda a: a.astype(jnp.bfloat16).astype(jnp.float32)

    def lin(v, w, b):
        return bf(v) @ bf(w).T + b

    h = lin(lin(x, p["mlp0_w"], p["mlp0_b"]), p["mlp1_w"], p["mlp1_b"])
    f = lin(jax.nn.relu(lin(h, p["ff1_w"], p["ff1_b"])), p["ff2_w"], p["ff2_b"])
    return _layernorm(f + h, p["ln_g"], p["ln_b"])


if __name__ == "__main__":
    B, S, D = 2, 8, 32
    key = jax.random.PRNGKey(0)
    k_x, k_p = jax.random.split(key)
    x = jax.random.normal(k_x, (B, S, D), jnp.float32)
    params = init_params(k_p, D)

    out = jax.block_until_ready(mlpfan_block(x, params))
    assert out.shape == (B, S, D)

    ref_matched = mlpfan_ref_matched(x, params)   # same bf16 operand rounding
    ref_f32 = mlpfan_ref(x, params)               # full-f32 PyTorch semantics

    err_matched = float(jnp.max(jnp.abs(out - ref_matched)))
    err_f32 = float(jnp.max(jnp.abs(out - ref_f32)))
    assert err_matched < 2e-3, ("matched-precision mismatch", err_matched)
    assert err_f32 < 1e-1, ("f32-reference mismatch", err_f32)
    print("KERNEL_OK")
</pallas_src>

<mosaic_0001>
module attributes {stable_mosaic.version = 11 : i64} {
  func.func @mlpfan_kernel(%arg0: i32, %arg1: memref<16x128xbf16, #tpu.memory_space<vmem>>, %arg2: memref<128x128xbf16, #tpu.memory_space<vmem>>, %arg3: memref<128x128xbf16, #tpu.memory_space<vmem>>, %arg4: memref<128x128xbf16, #tpu.memory_space<vmem>>, %arg5: memref<128x128xbf16, #tpu.memory_space<vmem>>, %arg6: memref<8x128xf32, #tpu.memory_space<vmem>>, %arg7: memref<16x128xf32, #tpu.memory_space<vmem>>) attributes {dimension_semantics = [#tpu.dimension_semantics<parallel>], iteration_bounds = array<i64: 1>, scalar_prefetch = 0 : i64, scratch_operands = 0 : i64, tpu.core_type = #tpu.core_type<tc>, window_params = [{transform_indices = @transform_0, window_bounds = array<i64: 16, 128>}, {pipeline_mode = #tpu.pipeline_mode<synchronous>, transform_indices = @transform_1, window_bounds = array<i64: 128, 128>}, {pipeline_mode = #tpu.pipeline_mode<synchronous>, transform_indices = @transform_2, window_bounds = array<i64: 128, 128>}, {pipeline_mode = #tpu.pipeline_mode<synchronous>, transform_indices = @transform_3, window_bounds = array<i64: 128, 128>}, {pipeline_mode = #tpu.pipeline_mode<synchronous>, transform_indices = @transform_4, window_bounds = array<i64: 128, 128>}, {pipeline_mode = #tpu.pipeline_mode<synchronous>, transform_indices = @transform_5, window_bounds = array<i64: 8, 128>}, {transform_indices = @transform_6, window_bounds = array<i64: 16, 128>}]} {
    %c0 = arith.constant 0 : index
    %c0_0 = arith.constant 0 : index
    %0 = vector.load %arg6[%c0, %c0_0] : memref<8x128xf32, #tpu.memory_space<vmem>>, vector<1x128xf32>
    %c1 = arith.constant 1 : index
    %c0_1 = arith.constant 0 : index
    %1 = vector.load %arg6[%c1, %c0_1] : memref<8x128xf32, #tpu.memory_space<vmem>>, vector<1x128xf32>
    %c2 = arith.constant 2 : index
    %c0_2 = arith.constant 0 : index
    %2 = vector.load %arg6[%c2, %c0_2] : memref<8x128xf32, #tpu.memory_space<vmem>>, vector<1x128xf32>
    %c3 = arith.constant 3 : index
    %c0_3 = arith.constant 0 : index
    %3 = vector.load %arg6[%c3, %c0_3] : memref<8x128xf32, #tpu.memory_space<vmem>>, vector<1x128xf32>
    %c4 = arith.constant 4 : index
    %c0_4 = arith.constant 0 : index
    %4 = vector.load %arg6[%c4, %c0_4] : memref<8x128xf32, #tpu.memory_space<vmem>>, vector<1x128xf32>
    %c5 = arith.constant 5 : index
    %c0_5 = arith.constant 0 : index
    %5 = vector.load %arg6[%c5, %c0_5] : memref<8x128xf32, #tpu.memory_space<vmem>>, vector<1x128xf32>
    %6 = tpu.iota {dimensions = array<i32: 1>} : vector<1x128xi32>
    %c32_i32 = arith.constant 32 : i32
    %7 = vector.broadcast %c32_i32 : i32 to vector<1x128xi32>
    %8 = arith.cmpi slt, %6, %7 : vector<1x128xi32>
    %c0_6 = arith.constant 0 : index
    %c0_7 = arith.constant 0 : index
    %9 = vector.load %arg1[%c0_6, %c0_7] : memref<16x128xbf16, #tpu.memory_space<vmem>>, vector<16x128xbf16>
    %c0_8 = arith.constant 0 : index
    %c0_9 = arith.constant 0 : index
    %10 = vector.load %arg2[%c0_8, %c0_9] : memref<128x128xbf16, #tpu.memory_space<vmem>>, vector<128x128xbf16>
    %cst = arith.constant dense<0.000000e+00> : vector<16x128xf32>
    %11 = tpu.matmul %9, %10, %cst {dimension_numbers = #tpu.dot_dimension_numbers<[1], [0], [0], [1], [0, 0, 1, 1], [], []>} : vector<16x128xbf16>, vector<128x128xbf16>, vector<16x128xf32> -> vector<16x128xf32>
    %12 = vector.broadcast %0 : vector<1x128xf32> to vector<16x128xf32>
    %13 = arith.addf %11, %12 : vector<16x128xf32>
    %14 = arith.truncf %13 : vector<16x128xf32> to vector<16x128xbf16>
    %c0_10 = arith.constant 0 : index
    %c0_11 = arith.constant 0 : index
    %15 = vector.load %arg3[%c0_10, %c0_11] : memref<128x128xbf16, #tpu.memory_space<vmem>>, vector<128x128xbf16>
    %cst_12 = arith.constant dense<0.000000e+00> : vector<16x128xf32>
    %16 = tpu.matmul %14, %15, %cst_12 {dimension_numbers = #tpu.dot_dimension_numbers<[1], [0], [0], [1], [0, 0, 1, 1], [], []>} : vector<16x128xbf16>, vector<128x128xbf16>, vector<16x128xf32> -> vector<16x128xf32>
    %17 = vector.broadcast %1 : vector<1x128xf32> to vector<16x128xf32>
    %18 = arith.addf %16, %17 : vector<16x128xf32>
    %19 = arith.truncf %18 : vector<16x128xf32> to vector<16x128xbf16>
    %c0_13 = arith.constant 0 : index
    %c0_14 = arith.constant 0 : index
    %20 = vector.load %arg4[%c0_13, %c0_14] : memref<128x128xbf16, #tpu.memory_space<vmem>>, vector<128x128xbf16>
    %cst_15 = arith.constant dense<0.000000e+00> : vector<16x128xf32>
    %21 = tpu.matmul %19, %20, %cst_15 {dimension_numbers = #tpu.dot_dimension_numbers<[1], [0], [0], [1], [0, 0, 1, 1], [], []>} : vector<16x128xbf16>, vector<128x128xbf16>, vector<16x128xf32> -> vector<16x128xf32>
    %22 = vector.broadcast %2 : vector<1x128xf32> to vector<16x128xf32>
    %23 = arith.addf %21, %22 : vector<16x128xf32>
    %cst_16 = arith.constant 0.000000e+00 : f32
    %24 = vector.broadcast %cst_16 : f32 to vector<16x128xf32>
    %25 = arith.maximumf %23, %24 : vector<16x128xf32>
    %26 = arith.truncf %25 : vector<16x128xf32> to vector<16x128xbf16>
    %c0_17 = arith.constant 0 : index
    %c0_18 = arith.constant 0 : index
    %27 = vector.load %arg5[%c0_17, %c0_18] : memref<128x128xbf16, #tpu.memory_space<vmem>>, vector<128x128xbf16>
    %cst_19 = arith.constant dense<0.000000e+00> : vector<16x128xf32>
    %28 = tpu.matmul %26, %27, %cst_19 {dimension_numbers = #tpu.dot_dimension_numbers<[1], [0], [0], [1], [0, 0, 1, 1], [], []>} : vector<16x128xbf16>, vector<128x128xbf16>, vector<16x128xf32> -> vector<16x128xf32>
    %29 = vector.broadcast %3 : vector<1x128xf32> to vector<16x128xf32>
    %30 = arith.addf %28, %29 : vector<16x128xf32>
    %31 = arith.addf %30, %18 : vector<16x128xf32>
    %cst_20 = arith.constant dense<0.000000e+00> : vector<16xf32>
    %32 = vector.multi_reduction <add>, %31, %cst_20 [1] : vector<16x128xf32> to vector<16xf32>
    %33 = vector.shape_cast %32 : vector<16xf32> to vector<16x1xf32>
    %cst_21 = arith.constant 3.125000e-02 : f32
    %34 = vector.broadcast %cst_21 : f32 to vector<16x1xf32>
    %35 = arith.mulf %33, %34 : vector<16x1xf32>
    %36 = vector.broadcast %35 : vector<16x1xf32> to vector<16x128xf32>
    %37 = arith.subf %31, %36 : vector<16x128xf32>
    %cst_22 = arith.constant 0.000000e+00 : f32
    %38 = vector.shape_cast %8 : vector<1x128xi1> to vector<1x128xi1>
    %39 = vector.broadcast %38 : vector<1x128xi1> to vector<16x128xi1>
    %40 = vector.broadcast %cst_22 : f32 to vector<16x128xf32>
    %41 = arith.select %39, %37, %40 : vector<16x128xi1>, vector<16x128xf32>
    %42 = arith.mulf %41, %41 : vector<16x128xf32>
    %cst_23 = arith.constant dense<0.000000e+00> : vector<16xf32>
    %43 = vector.multi_reduction <add>, %42, %cst_23 [1] : vector<16x128xf32> to vector<16xf32>
    %44 = vector.shape_cast %43 : vector<16xf32> to vector<16x1xf32>
    %cst_24 = arith.constant 3.125000e-02 : f32
    %45 = vector.broadcast %cst_24 : f32 to vector<16x1xf32>
    %46 = arith.mulf %44, %45 : vector<16x1xf32>
    %cst_25 = arith.constant 9.99999974E-6 : f32
    %47 = vector.broadcast %cst_25 : f32 to vector<16x1xf32>
    %48 = arith.addf %46, %47 : vector<16x1xf32>
    %49 = math.rsqrt %48 : vector<16x1xf32>
    %50 = vector.broadcast %49 : vector<16x1xf32> to vector<16x128xf32>
    %51 = arith.mulf %41, %50 : vector<16x128xf32>
    %52 = vector.broadcast %4 : vector<1x128xf32> to vector<16x128xf32>
    %53 = arith.mulf %51, %52 : vector<16x128xf32>
    %54 = vector.broadcast %5 : vector<1x128xf32> to vector<16x128xf32>
    %55 = arith.addf %53, %54 : vector<16x128xf32>
    %c0_26 = arith.constant 0 : index
    %c0_27 = arith.constant 0 : index
    %56 = vector.load %arg7[%c0_26, %c0_27] : memref<16x128xf32, #tpu.memory_space<vmem>>, vector<16x128xf32>
    tpu.vector_store %arg7[%c0_26, %c0_27], %55 {strides = array<i32>} : memref<16x128xf32, #tpu.memory_space<vmem>>, vector<16x128xf32>,
    return
  }
  func.func @transform_0(%arg0: i32) -> (i32, i32) {
    %c0_i32 = arith.constant 0 : i32
    %c0_i32_0 = arith.constant 0 : i32
    return %arg0, %c0_i32 : i32, i32
  }
  func.func @transform_1(%arg0: i32) -> (i32, i32) {
    %c0_i32 = arith.constant 0 : i32
    %c0_i32_0 = arith.constant 0 : i32
    %c0_i32_1 = arith.constant 0 : i32
    return %c0_i32, %c0_i32_0 : i32, i32
  }
  func.func @transform_2(%arg0: i32) -> (i32, i32) {
    %c0_i32 = arith.constant 0 : i32
    %c0_i32_0 = arith.constant 0 : i32
    %c0_i32_1 = arith.constant 0 : i32
    return %c0_i32, %c0_i32_0 : i32, i32
  }
  func.func @transform_3(%arg0: i32) -> (i32, i32) {
    %c0_i32 = arith.constant 0 : i32
    %c0_i32_0 = arith.constant 0 : i32
    %c0_i32_1 = arith.constant 0 : i32
    return %c0_i32, %c0_i32_0 : i32, i32
  }
  func.func @transform_4(%arg0: i32) -> (i32, i32) {
    %c0_i32 = arith.constant 0 : i32
    %c0_i32_0 = arith.constant 0 : i32
    %c0_i32_1 = arith.constant 0 : i32
    return %c0_i32, %c0_i32_0 : i32, i32
  }
  func.func @transform_5(%arg0: i32) -> (i32, i32) {
    %c0_i32 = arith.constant 0 : i32
    %c0_i32_0 = arith.constant 0 : i32
    %c0_i32_1 = arith.constant 0 : i32
    return %c0_i32, %c0_i32_0 : i32, i32
  }
  func.func @transform_6(%arg0: i32) -> (i32, i32) {
    %c0_i32 = arith.constant 0 : i32
    %c0_i32_0 = arith.constant 0 : i32
    return %arg0, %c0_i32 : i32, i32
  }
}

</mosaic_0001>

<llo_original>
// kernel: tpu_custom_call.1
$region0: #{tpu_custom_call.1}
  #allocation0 [shape = 'u32[]', space=smem, size = 0x4, offset = 0x4, fixed_abs, tag = 'smem constant byte address 0x4 - core index']
  #allocation1 [shape = 'u32[144,128]{1,0:T(1,128)}', space=vmem, size = 0x12000, scoped, tag = 'internal scratch']
  %s0 = inlined_call_operand.hbm [shape: bf16[16,128], index: 0, kind: input, shape index: {}]
  %s1 = inlined_call_operand.hbm [shape: bf16[128,128], index: 1, kind: input, shape index: {}]
  %s2 = inlined_call_operand.hbm [shape: bf16[128,128], index: 2, kind: input, shape index: {}]
  %s3 = inlined_call_operand.hbm [shape: bf16[128,128], index: 3, kind: input, shape index: {}]
  %s4 = inlined_call_operand.hbm [shape: bf16[128,128], index: 4, kind: input, shape index: {}]
  %s5 = inlined_call_operand.vmem [shape: f32[8,128], index: 5, kind: input, shape index: {}]
  %s6 = inlined_call_operand.hbm [shape: f32[16,128], index: 6, kind: output, shape index: {}]
  %s7 = sld [smem:[#allocation0]]
  $region54: #{tpu_custom_call.1} parent=0
    _
  %s9 = ssub.s32 1, %s7
  %s10 = scalar_select 0, %s9, %s7
  $region1: #{tpu_custom_call.1} parent=0
    #allocation2 [shape = 'u8[4096]{0}', space=vmem, size = 0x1000, scoped, tag = 'input window, operand 0, single buffered']
    #allocation3 [shape = 's32[1]{0}', space=sflag, size = 0x4, scoped, tag = 'scoped memory for tpu_custom_call.1']
    #allocation4 [shape = 's32[1]{0}', space=sflag, size = 0x4, scoped, tag = 'scoped memory for tpu_custom_call.1']
    #allocation5 [shape = 'u8[32768]{0}', space=vmem, size = 0x8000, scoped, tag = 'input window, operand 1, single buffered']
    #allocation6 [shape = 's32[1]{0}', space=sflag, size = 0x4, scoped, tag = 'scoped memory for tpu_custom_call.1']
    #allocation7 [shape = 'u8[32768]{0}', space=vmem, size = 0x8000, scoped, tag = 'input window, operand 2, single buffered']
    #allocation8 [shape = 'u8[32768]{0}', space=vmem, size = 0x8000, scoped, tag = 'input window, operand 3, single buffered']
    #allocation9 [shape = 's32[1]{0}', space=sflag, size = 0x4, scoped, tag = 'scoped memory for tpu_custom_call.1']
    #allocation10 [shape = 'u8[32768]{0}', space=vmem, size = 0x8000, scoped, tag = 'input window, operand 4, single buffered']
    #allocation11 [shape = 'u8[8192]{0}', space=vmem, size = 0x2000, scoped, tag = 'output window, operand 0, single buffered']
    %11 = vsyncpa [#allocation3], 0
    %12 = vsyncpa [#allocation6], 0
    %13 = vsyncpa [#allocation9], 0
    %14 = vsyncpa [#allocation4], 0
    // Predicated region
    $region2: #{tpu_custom_call.1} parent=1 // pred_check
      _
    $region3: #{tpu_custom_call.1} parent=1 // pred_check_branch
      %16 = sbr.rel (0) target = $region5
    $region4: #{tpu_custom_call.1} parent=1 // pred_region
      %s18 = ssub.s32 128, 128
      %19 = vsyncadd [#allocation3], %s18
      %s20 = sshll.u32 [#allocation2], 4
      %s21 = int_to_ptr.vmem [resolvable:$true] %s20
      %26 = dma.hbm_to_vmem [thread:$0]  %s0, 128, %s21, [#allocation3], 64, 64, 4
    $region5: #{tpu_custom_call.1} parent=1 // pred_fallthru
      _
    // Predicated region
    $region6: #{tpu_custom_call.1} parent=1 // pred_check
      _
    $region7: #{tpu_custom_call.1} parent=1 // pred_check_branch
      %28 = sbr.rel (0) target = $region9
    $region8: #{tpu_custom_call.1} parent=1 // pred_region
      %s30 = ssub.s32 1024, 1024
      %31 = vsyncadd [#allocation6], %s30
      %s32 = sshll.u32 [#allocation5], 4
      %s33 = int_to_ptr.vmem [resolvable:$true] %s32
      %38 = dma.hbm_to_vmem [thread:$0]  %s1, 1024, %s33, [#allocation6], 64, 64, 4
    $region9: #{tpu_custom_call.1} parent=1 // pred_fallthru
      _
    // Predicated region
    $region10: #{tpu_custom_call.1} parent=1 // pred_check
      _
    $region11: #{tpu_custom_call.1} parent=1 // pred_check_branch
      %40 = sbr.rel (0) target = $region13
    $region12: #{tpu_custom_call.1} parent=1 // pred_region
      %s42 = ssub.s32 1024, 1024
      %43 = vsyncadd [#allocation6], %s42
      %s44 = sshll.u32 [#allocation7], 4
      %s45 = int_to_ptr.vmem [resolvable:$true] %s44
      %50 = dma.hbm_to_vmem [thread:$0]  %s2, 1024, %s45, [#allocation6], 64, 64, 4
    $region13: #{tpu_custom_call.1} parent=1 // pred_fallthru
      _
    // Predicated region
    $region14: #{tpu_custom_call.1} parent=1 // pred_check
      _
    $region15: #{tpu_custom_call.1} parent=1 // pred_check_branch
      %52 = sbr.rel (0) target = $region17
    $region16: #{tpu_custom_call.1} parent=1 // pred_region
      %s54 = ssub.s32 1024, 1024
      %55 = vsyncadd [#allocation9], %s54
      %s56 = sshll.u32 [#allocation8], 4
      %s57 = int_to_ptr.vmem [resolvable:$true] %s56
      %62 = dma.hbm_to_vmem [thread:$0]  %s3, 1024, %s57, [#allocation9], 64, 64, 4
    $region17: #{tpu_custom_call.1} parent=1 // pred_fallthru
      _
    // Predicated region
    $region18: #{tpu_custom_call.1} parent=1 // pred_check
      _
    $region19: #{tpu_custom_call.1} parent=1 // pred_check_branch
      %64 = sbr.rel (0) target = $region21
    $region20: #{tpu_custom_call.1} parent=1 // pred_region
      %s66 = ssub.s32 1024, 1024
      %67 = vsyncadd [#allocation9], %s66
      %s68 = sshll.u32 [#allocation10], 4
      %s69 = int_to_ptr.vmem [resolvable:$true] %s68
      %74 = dma.hbm_to_vmem [thread:$0]  %s4, 1024, %s69, [#allocation9], 64, 64, 4
    $region21: #{tpu_custom_call.1} parent=1 // pred_fallthru
      _
    // Predicated region
    $region22: #{tpu_custom_call.1} parent=1 // pred_check
      _
    $region23: #{tpu_custom_call.1} parent=1 // pred_check_branch
      %76 = sbr.rel (0) target = $region25
    $region24: #{tpu_custom_call.1} parent=1 // pred_region
      _
    $region25: #{tpu_custom_call.1} parent=1 // pred_fallthru
      _
    // Predicated region
    $region26: #{tpu_custom_call.1} parent=1 // pred_check
      _
    $region27: #{tpu_custom_call.1} parent=1 // pred_check_branch
      %78 = sbr.rel (0) target = $region29
    $region28: #{tpu_custom_call.1} parent=1 // pred_region
      %79 = dma.done [#allocation3], 128
    $region29: #{tpu_custom_call.1} parent=1 // pred_fallthru
      _
    // Predicated region
    $region30: #{tpu_custom_call.1} parent=1 // pred_check
      _
    $region31: #{tpu_custom_call.1} parent=1 // pred_check_branch
      %81 = sbr.rel (0) target = $region33
    $region32: #{tpu_custom_call.1} parent=1 // pred_region
      %82 = dma.done [#allocation6], 1024
    $region33: #{tpu_custom_call.1} parent=1 // pred_fallthru
      _
    // Predicated region
    $region34: #{tpu_custom_call.1} parent=1 // pred_check
      _
    $region35: #{tpu_custom_call.1} parent=1 // pred_check_branch
      %84 = sbr.rel (0) target = $region37
    $region36: #{tpu_custom_call.1} parent=1 // pred_region
      %85 = dma.done [#allocation6], 1024
    $region37: #{tpu_custom_call.1} parent=1 // pred_fallthru
      _
    // Predicated region
    $region38: #{tpu_custom_call.1} parent=1 // pred_check
      _
    $region39: #{tpu_custom_call.1} parent=1 // pred_check_branch
      %87 = sbr.rel (0) target = $region41
    $region40: #{tpu_custom_call.1} parent=1 // pred_region
      %88 = dma.done [#allocation9], 1024
    $region41: #{tpu_custom_call.1} parent=1 // pred_fallthru
      _
    // Predicated region
    $region42: #{tpu_custom_call.1} parent=1 // pred_check
      _
    $region43: #{tpu_custom_call.1} parent=1 // pred_check_branch
      %90 = sbr.rel (0) target = $region45
    $region44: #{tpu_custom_call.1} parent=1 // pred_region
      %91 = dma.done [#allocation9], 1024
    $region45: #{tpu_custom_call.1} parent=1 // pred_fallthru
      _
    %v93 = vld [vmem:[%s5] sm:$0x1]
    %v94 = vld [vmem:[%s5 + $0x1] sm:$0x1]
    %v95 = vld [vmem:[%s5 + $0x2] sm:$0x1]
    %v96 = vld [vmem:[%s5 + $0x3] sm:$0x1]
    %v97 = vld [vmem:[%s5 + $0x4] sm:$0x1]
    %v98 = vld [vmem:[%s5 + $0x5] sm:$0x1]
    %v99 = vlaneseq
    %v100 = vand.u32 %v99, 127
    %vm101 = vcmp.lt.s32.totalorder %v100, 32
    %v102 = vld [vmem:[#allocation2] sm:$0xf]
    %v103 = vld [vmem:[#allocation2 + $0x4] sm:$0xf]
    %v104 = vld [vmem:[#allocation5] sm:$0xf]
    %v105 = vld [vmem:[#allocation5 + $0x4] sm:$0xf]
    %v106 = vld [vmem:[#allocation5 + $0x8] sm:$0xf]
    %v107 = vld [vmem:[#allocation5 + $0xc] sm:$0xf]
    %v108 = vld [vmem:[#allocation5 + $0x10] sm:$0xf]
    %v109 = vld [vmem:[#allocation5 + $0x14] sm:$0xf]
    %v110 = vld [vmem:[#allocation5 + $0x18] sm:$0xf]
    %v111 = vld [vmem:[#allocation5 + $0x1c] sm:$0xf]
    %v112 = vld [vmem:[#allocation5 + $0x20] sm:$0xf]
    %v113 = vld [vmem:[#allocation5 + $0x24] sm:$0xf]
    %v114 = vld [vmem:[#allocation5 + $0x28] sm:$0xf]
    %v115 = vld [vmem:[#allocation5 + $0x2c] sm:$0xf]
    %v116 = vld [vmem:[#allocation5 + $0x30] sm:$0xf]
    %v117 = vld [vmem:[#allocation5 + $0x34] sm:$0xf]
    %v118 = vld [vmem:[#allocation5 + $0x38] sm:$0xf]
    %v119 = vld [vmem:[#allocation5 + $0x3c] sm:$0xf]
    %v120 = vlaneseq
    %v121 = vshrl.u32 %v120, 7
    %v122 = vsub.s32 0, %v121
    %v123 = vrot.slane %v93, %v122
    %v126 = vunpack.c.l.b16 %v102
    %v127 = vunpack.c.l.b16 %v103
    %v128 = vpack.c.b16 %v127, %v126
    %v146 = vunpack.c.l.b16 %v104
    %v147 = vunpack.c.l.b16 %v105
    %v148 = vunpack.c.l.b16 %v106
    %v149 = vunpack.c.l.b16 %v107
    %v150 = vunpack.c.l.b16 %v108
    %v151 = vunpack.c.l.b16 %v109
    %v152 = vunpack.c.l.b16 %v110
    %v153 = vunpack.c.l.b16 %v111
    %v154 = vunpack.c.l.b16 %v112
    %v155 = vunpack.c.l.b16 %v113
    %v156 = vunpack.c.l.b16 %v114
    %v157 = vunpack.c.l.b16 %v115
    %v158 = vunpack.c.l.b16 %v116
    %v159 = vunpack.c.l.b16 %v117
    %v160 = vunpack.c.l.b16 %v118
    %v161 = vunpack.c.l.b16 %v119
    %v162 = vpack.c.b16 %v147, %v146
    %v163 = vpack.c.b16 %v149, %v148
    %v164 = vpack.c.b16 %v151, %v150
    %v165 = vpack.c.b16 %v153, %v152
    %v166 = vpack.c.b16 %v155, %v154
    %v167 = vpack.c.b16 %v157, %v156
    %v168 = vpack.c.b16 %v159, %v158
    %v169 = vpack.c.b16 %v161, %v160
    %178 = vmatprep.subr.bf16.mxu0 0
    %179 = vmatpush1.bf16.msra.mxu0 %v162
    %180 = vmatprep.subr.bf16.mxu0 0
    %181 = vmatpush1.bf16.msra.mxu0 %v163
    %182 = vmatprep.subr.bf16.mxu0 0
    %183 = vmatpush1.bf16.msra.mxu0 %v164
    %184 = vmatprep.subr.bf16.mxu0 0
    %185 = vmatpush1.bf16.msra.mxu0 %v165
    %186 = vmatprep.subr.bf16.mxu0 0
    %187 = vmatpush1.bf16.msra.mxu0 %v166
    %188 = vmatprep.subr.bf16.mxu0 0
    %189 = vmatpush1.bf16.msra.mxu0 %v167
    %190 = vmatprep.subr.bf16.mxu0 0
    %191 = vmatpush1.bf16.msra.mxu0 %v168
    %192 = vmatprep.subr.bf16.mxu0 0
    %193 = vmatpush1.bf16.msra.mxu0 %v169
    %194 = vmatprep.subr.bf16.mxu0 0
    %195 = vmatpush1.bf16.msra.mxu0 0
    %196 = vmatprep.subr.bf16.mxu0 0
    %197 = vmatpush1.bf16.msra.mxu0 0
    %198 = vmatprep.subr.bf16.mxu0 0
    %199 = vmatpush1.bf16.msra.mxu0 0
    %200 = vmatprep.subr.bf16.mxu0 0
    %201 = vmatpush1.bf16.msra.mxu0 0
    %202 = vmatprep.subr.bf16.mxu0 0
    %203 = vmatpush1.bf16.msra.mxu0 0
    %204 = vmatprep.subr.bf16.mxu0 0
    %205 = vmatpush1.bf16.msra.mxu0 0
    %206 = vmatprep.subr.bf16.mxu0 0
    %207 = vmatpush1.bf16.msra.mxu0 0
    %208 = vmatprep.subr.bf16.mxu0 0
    %209 = vmatpush1.bf16.msra.mxu0 0
    %210 = vmatprep.mubr.bf16.mxu0 0
    %211 = vmatmul.mubr.bf16.gmra.mrb[0].mxu0 %v128
    %v212 = vpop.f32.mrb[0].mxu0
    %v213 = vadd.f32 %v123, %v212
    %v214 = vpop.f32.mrb[0].mxu0
    %v215 = vpop.f32.mrb[0].mxu0
    %v216 = vadd.f32 %v123, %v215
    %v217 = vpop.f32.mrb[0].mxu0
    %218 = vdwg.mxu0
    %v219 = vpack.c.bf16 %v216, %v213
    %v220 = vld [vmem:[#allocation7] sm:$0xf]
    %v221 = vld [vmem:[#allocation7 + $0x4] sm:$0xf]
    %v222 = vld [vmem:[#allocation7 + $0x8] sm:$0xf]
    %v223 = vld [vmem:[#allocation7 + $0xc] sm:$0xf]
    %v224 = vld [vmem:[#allocation7 + $0x10] sm:$0xf]
    %v225 = vld [vmem:[#allocation7 + $0x14] sm:$0xf]
    %v226 = vld [vmem:[#allocation7 + $0x18] sm:$0xf]
    %v227 = vld [vmem:[#allocation7 + $0x1c] sm:$0xf]
    %v228 = vld [vmem:[#allocation7 + $0x20] sm:$0xf]
    %v229 = vld [vmem:[#allocation7 + $0x24] sm:$0xf]
    %v230 = vld [vmem:[#allocation7 + $0x28] sm:$0xf]
    %v231 = vld [vmem:[#allocation7 + $0x2c] sm:$0xf]
    %v232 = vld [vmem:[#allocation7 + $0x30] sm:$0xf]
    %v233 = vld [vmem:[#allocation7 + $0x34] sm:$0xf]
    %v234 = vld [vmem:[#allocation7 + $0x38] sm:$0xf]
    %v235 = vld [vmem:[#allocation7 + $0x3c] sm:$0xf]
    %v236 = vlaneseq
    %v237 = vshrl.u32 %v236, 7
    %v238 = vsub.s32 0, %v237
    %v239 = vrot.slane %v94, %v238
    %v256 = vunpack.c.l.b16 %v220
    %v257 = vunpack.c.l.b16 %v221
    %v258 = vunpack.c.l.b16 %v222
    %v259 = vunpack.c.l.b16 %v223
    %v260 = vunpack.c.l.b16 %v224
    %v261 = vunpack.c.l.b16 %v225
    %v262 = vunpack.c.l.b16 %v226
    %v263 = vunpack.c.l.b16 %v227
    %v264 = vunpack.c.l.b16 %v228
    %v265 = vunpack.c.l.b16 %v229
    %v266 = vunpack.c.l.b16 %v230
    %v267 = vunpack.c.l.b16 %v231
    %v268 = vunpack.c.l.b16 %v232
    %v269 = vunpack.c.l.b16 %v233
    %v270 = vunpack.c.l.b16 %v234
    %v271 = vunpack.c.l.b16 %v235
    %v272 = vpack.c.b16 %v257, %v256
    %v273 = vpack.c.b16 %v259, %v258
    %v274 = vpack.c.b16 %v261, %v260
    %v275 = vpack.c.b16 %v263, %v262
    %v276 = vpack.c.b16 %v265, %v264
    %v277 = vpack.c.b16 %v267, %v266
    %v278 = vpack.c.b16 %v269, %v268
    %v279 = vpack.c.b16 %v271, %v270
    %288 = vmatprep.subr.bf16.mxu0 0
    %289 = vmatpush1.bf16.msra.mxu0 %v272
    %290 = vmatprep.subr.bf16.mxu0 0
    %291 = vmatpush1.bf16.msra.mxu0 %v273
    %292 = vmatprep.subr.bf16.mxu0 0
    %293 = vmatpush1.bf16.msra.mxu0 %v274
    %294 = vmatprep.subr.bf16.mxu0 0
    %295 = vmatpush1.bf16.msra.mxu0 %v275
    %296 = vmatprep.subr.bf16.mxu0 0
    %297 = vmatpush1.bf16.msra.mxu0 %v276
    %298 = vmatprep.subr.bf16.mxu0 0
    %299 = vmatpush1.bf16.msra.mxu0 %v277
    %300 = vmatprep.subr.bf16.mxu0 0
    %301 = vmatpush1.bf16.msra.mxu0 %v278
    %302 = vmatprep.subr.bf16.mxu0 0
    %303 = vmatpush1.bf16.msra.mxu0 %v279
    %304 = vmatprep.subr.bf16.mxu0 0
    %305 = vmatpush1.bf16.msra.mxu0 0
    %306 = vmatprep.subr.bf16.mxu0 0
    %307 = vmatpush1.bf16.msra.mxu0 0
    %308 = vmatprep.subr.bf16.mxu0 0
    %309 = vmatpush1.bf16.msra.mxu0 0
    %310 = vmatprep.subr.bf16.mxu0 0
    %311 = vmatpush1.bf16.msra.mxu0 0
    %312 = vmatprep.subr.bf16.mxu0 0
    %313 = vmatpush1.bf16.msra.mxu0 0
    %314 = vmatprep.subr.bf16.mxu0 0
    %315 = vmatpush1.bf16.msra.mxu0 0
    %316 = vmatprep.subr.bf16.mxu0 0
    %317 = vmatpush1.bf16.msra.mxu0 0
    %318 = vmatprep.subr.bf16.mxu0 0
    %319 = vmatpush1.bf16.msra.mxu0 0
    %320 = vmatprep.mubr.bf16.mxu0 0
    %321 = vmatmul.mubr.bf16.gmra.mrb[0].mxu0 %v219
    %v322 = vpop.f32.mrb[0].mxu0
    %v323 = vadd.f32 %v239, %v322
    %v324 = vpop.f32.mrb[0].mxu0
    %v325 = vpop.f32.mrb[0].mxu0
    %v326 = vadd.f32 %v239, %v325
    %v327 = vpop.f32.mrb[0].mxu0
    %328 = vdwg.mxu0
    %v329 = vpack.c.bf16 %v326, %v323
    %v330 = vld [vmem:[#allocation8] sm:$0xf]
    %v331 = vld [vmem:[#allocation8 + $0x4] sm:$0xf]
    %v332 = vld [vmem:[#allocation8 + $0x8] sm:$0xf]
    %v333 = vld [vmem:[#allocation8 + $0xc] sm:$0xf]
    %v334 = vld [vmem:[#allocation8 + $0x10] sm:$0xf]
    %v335 = vld [vmem:[#allocation8 + $0x14] sm:$0xf]
    %v336 = vld [vmem:[#allocation8 + $0x18] sm:$0xf]
    %v337 = vld [vmem:[#allocation8 + $0x1c] sm:$0xf]
    %v338 = vld [vmem:[#allocation8 + $0x20] sm:$0xf]
    %v339 = vld [vmem:[#allocation8 + $0x24] sm:$0xf]
    %v340 = vld [vmem:[#allocation8 + $0x28] sm:$0xf]
    %v341 = vld [vmem:[#allocation8 + $0x2c] sm:$0xf]
    %v342 = vld [vmem:[#allocation8 + $0x30] sm:$0xf]
    %v343 = vld [vmem:[#allocation8 + $0x34] sm:$0xf]
    %v344 = vld [vmem:[#allocation8 + $0x38] sm:$0xf]
    %v345 = vld [vmem:[#allocation8 + $0x3c] sm:$0xf]
    %v346 = vlaneseq
    %v347 = vshrl.u32 %v346, 7
    %v348 = vsub.s32 0, %v347
    %v349 = vrot.slane %v95, %v348
    %v366 = vunpack.c.l.b16 %v330
    %v367 = vunpack.c.l.b16 %v331
    %v368 = vunpack.c.l.b16 %v332
    %v369 = vunpack.c.l.b16 %v333
    %v370 = vunpack.c.l.b16 %v334
    %v371 = vunpack.c.l.b16 %v335
    %v372 = vunpack.c.l.b16 %v336
    %v373 = vunpack.c.l.b16 %v337
    %v374 = vunpack.c.l.b16 %v338
    %v375 = vunpack.c.l.b16 %v339
    %v376 = vunpack.c.l.b16 %v340
    %v377 = vunpack.c.l.b16 %v341
    %v378 = vunpack.c.l.b16 %v342
    %v379 = vunpack.c.l.b16 %v343
    %v380 = vunpack.c.l.b16 %v344
    %v381 = vunpack.c.l.b16 %v345
    %v382 = vpack.c.b16 %v367, %v366
    %v383 = vpack.c.b16 %v369, %v368
    %v384 = vpack.c.b16 %v371, %v370
    %v385 = vpack.c.b16 %v373, %v372
    %v386 = vpack.c.b16 %v375, %v374
    %v387 = vpack.c.b16 %v377, %v376
    %v388 = vpack.c.b16 %v379, %v378
    %v389 = vpack.c.b16 %v381, %v380
    %398 = vmatprep.subr.bf16.mxu0 0
    %399 = vmatpush1.bf16.msra.mxu0 %v382
    %400 = vmatprep.subr.bf16.mxu0 0
    %401 = vmatpush1.bf16.msra.mxu0 %v383
    %402 = vmatprep.subr.bf16.mxu0 0
    %403 = vmatpush1.bf16.msra.mxu0 %v384
    %404 = vmatprep.subr.bf16.mxu0 0
    %405 = vmatpush1.bf16.msra.mxu0 %v385
    %406 = vmatprep.subr.bf16.mxu0 0
    %407 = vmatpush1.bf16.msra.mxu0 %v386
    %408 = vmatprep.subr.bf16.mxu0 0
    %409 = vmatpush1.bf16.msra.mxu0 %v387
    %410 = vmatprep.subr.bf16.mxu0 0
    %411 = vmatpush1.bf16.msra.mxu0 %v388
    %412 = vmatprep.subr.bf16.mxu0 0
    %413 = vmatpush1.bf16.msra.mxu0 %v389
    %414 = vmatprep.subr.bf16.mxu0 0
    %415 = vmatpush1.bf16.msra.mxu0 0
    %416 = vmatprep.subr.bf16.mxu0 0
    %417 = vmatpush1.bf16.msra.mxu0 0
    %418 = vmatprep.subr.bf16.mxu0 0
    %419 = vmatpush1.bf16.msra.mxu0 0
    %420 = vmatprep.subr.bf16.mxu0 0
    %421 = vmatpush1.bf16.msra.mxu0 0
    %422 = vmatprep.subr.bf16.mxu0 0
    %423 = vmatpush1.bf16.msra.mxu0 0
    %424 = vmatprep.subr.bf16.mxu0 0
    %425 = vmatpush1.bf16.msra.mxu0 0
    %426 = vmatprep.subr.bf16.mxu0 0
    %427 = vmatpush1.bf16.msra.mxu0 0
    %428 = vmatprep.subr.bf16.mxu0 0
    %429 = vmatpush1.bf16.msra.mxu0 0
    %430 = vmatprep.mubr.bf16.mxu0 0
    %431 = vmatmul.mubr.bf16.gmra.mrb[0].mxu0 %v329
    %v432 = vpop.f32.mrb[0].mxu0
    %v433 = vadd.f32 %v349, %v432
    %v434 = vpop.f32.mrb[0].mxu0
    %v435 = vpop.f32.mrb[0].mxu0
    %v436 = vadd.f32 %v349, %v435
    %v437 = vpop.f32.mrb[0].mxu0
    %438 = vdwg.mxu0
    %v439 = vmax.f32 %v433, 0.0
    %v440 = vmax.f32 %v436, 0.0
    %v441 = vpack.c.bf16 %v440, %v439
    %v442 = vld [vmem:[#allocation10] sm:$0xf]
    %v443 = vld [vmem:[#allocation10 + $0x4] sm:$0xf]
    %v444 = vld [vmem:[#allocation10 + $0x8] sm:$0xf]
    %v445 = vld [vmem:[#allocation10 + $0xc] sm:$0xf]
    %v446 = vld [vmem:[#allocation10 + $0x10] sm:$0xf]
    %v447 = vld [vmem:[#allocation10 + $0x14] sm:$0xf]
    %v448 = vld [vmem:[#allocation10 + $0x18] sm:$0xf]
    %v449 = vld [vmem:[#allocation10 + $0x1c] sm:$0xf]
    %v450 = vld [vmem:[#allocation10 + $0x20] sm:$0xf]
    %v451 = vld [vmem:[#allocation10 + $0x24] sm:$0xf]
    %v452 = vld [vmem:[#allocation10 + $0x28] sm:$0xf]
    %v453 = vld [vmem:[#allocation10 + $0x2c] sm:$0xf]
    %v454 = vld [vmem:[#allocation10 + $0x30] sm:$0xf]
    %v455 = vld [vmem:[#allocation10 + $0x34] sm:$0xf]
    %v456 = vld [vmem:[#allocation10 + $0x38] sm:$0xf]
    %v457 = vld [vmem:[#allocation10 + $0x3c] sm:$0xf]
    %v458 = vlaneseq
    %v459 = vshrl.u32 %v458, 7
    %v460 = vsub.s32 0, %v459
    %v461 = vrot.slane %v96, %v460
    %v478 = vunpack.c.l.b16 %v442
    %v479 = vunpack.c.l.b16 %v443
    %v480 = vunpack.c.l.b16 %v444
    %v481 = vunpack.c.l.b16 %v445
    %v482 = vunpack.c.l.b16 %v446
    %v483 = vunpack.c.l.b16 %v447
    %v484 = vunpack.c.l.b16 %v448
    %v485 = vunpack.c.l.b16 %v449
    %v486 = vunpack.c.l.b16 %v450
    %v487 = vunpack.c.l.b16 %v451
    %v488 = vunpack.c.l.b16 %v452
    %v489 = vunpack.c.l.b16 %v453
    %v490 = vunpack.c.l.b16 %v454
    %v491 = vunpack.c.l.b16 %v455
    %v492 = vunpack.c.l.b16 %v456
    %v493 = vunpack.c.l.b16 %v457
    %v494 = vpack.c.b16 %v479, %v478
    %v495 = vpack.c.b16 %v481, %v480
    %v496 = vpack.c.b16 %v483, %v482
    %v497 = vpack.c.b16 %v485, %v484
    %v498 = vpack.c.b16 %v487, %v486
    %v499 = vpack.c.b16 %v489, %v488
    %v500 = vpack.c.b16 %v491, %v490
    %v501 = vpack.c.b16 %v493, %v492
    %510 = vmatprep.subr.bf16.mxu0 0
    %511 = vmatpush1.bf16.msra.mxu0 %v494
    %512 = vmatprep.subr.bf16.mxu0 0
    %513 = vmatpush1.bf16.msra.mxu0 %v495
    %514 = vmatprep.subr.bf16.mxu0 0
    %515 = vmatpush1.bf16.msra.mxu0 %v496
    %516 = vmatprep.subr.bf16.mxu0 0
    %517 = vmatpush1.bf16.msra.mxu0 %v497
    %518 = vmatprep.subr.bf16.mxu0 0
    %519 = vmatpush1.bf16.msra.mxu0 %v498
    %520 = vmatprep.subr.bf16.mxu0 0
    %521 = vmatpush1.bf16.msra.mxu0 %v499
    %522 = vmatprep.subr.bf16.mxu0 0
    %523 = vmatpush1.bf16.msra.mxu0 %v500
    %524 = vmatprep.subr.bf16.mxu0 0
    %525 = vmatpush1.bf16.msra.mxu0 %v501
    %526 = vmatprep.subr.bf16.mxu0 0
    %527 = vmatpush1.bf16.msra.mxu0 0
    %528 = vmatprep.subr.bf16.mxu0 0
    %529 = vmatpush1.bf16.msra.mxu0 0
    %530 = vmatprep.subr.bf16.mxu0 0
    %531 = vmatpush1.bf16.msra.mxu0 0
    %532 = vmatprep.subr.bf16.mxu0 0
    %533 = vmatpush1.bf16.msra.mxu0 0
    %534 = vmatprep.subr.bf16.mxu0 0
    %535 = vmatpush1.bf16.msra.mxu0 0
    %536 = vmatprep.subr.bf16.mxu0 0
    %537 = vmatpush1.bf16.msra.mxu0 0
    %538 = vmatprep.subr.bf16.mxu0 0
    %539 = vmatpush1.bf16.msra.mxu0 0
    %540 = vmatprep.subr.bf16.mxu0 0
    %541 = vmatpush1.bf16.msra.mxu0 0
    %542 = vmatprep.mubr.bf16.mxu0 0
    %543 = vmatmul.mubr.bf16.gmra.mrb[0].mxu0 %v441
    %v544 = vpop.f32.mrb[0].mxu0
    %v545 = vadd.f32 %v461, %v544
    %v546 = vpop.f32.mrb[0].mxu0
    %v547 = vpop.f32.mrb[0].mxu0
    %v548 = vadd.f32 %v461, %v547
    %v549 = vpop.f32.mrb[0].mxu0
    %550 = vdwg.mxu0
    %v551 = vadd.f32 %v545, %v323
    %v552 = vadd.f32 %v548, %v326
    %553 = vadd.xlane.f32.xlu0 %v551
    %v554 = vpop.xlane.xlu0 %553
    %555 = vadd.xlane.f32.xlu0 %v552
    %v556 = vpop.xlane.xlu0 %555
    %v557 = vmul.f32 %v554, 0.03125
    %v558 = vmul.f32 %v556, 0.03125
    %v559 = vsub.f32 %v551, %v557
    %v560 = vsub.f32 %v552, %v558
    %v561 = vsel %vm101, 1, 0
    %vm562 = vcmp.eq.s32.totalorder %v561, 1
    %v563 = vsel %vm562, %v559, 0.0
    %v564 = vsel %vm562, %v560, 0.0
    %v565 = vmul.f32 %v563, %v563
    %v566 = vmul.f32 %v564, %v564
    %567 = vadd.xlane.f32.xlu0 %v565
    %v568 = vpop.xlane.xlu0 %567
    %569 = vadd.xlane.f32.xlu0 %v566
    %v570 = vpop.xlane.xlu0 %569
    %v571 = vmul.f32 %v568, 0.03125
    %v572 = vmul.f32 %v570, 0.03125
    %v573 = vadd.f32 %v571, 1e-05
    %v574 = vadd.f32 %v572, 1e-05
    %v575 = vrsqrt.pop %v573
    %v576 = vrsqrt.pop %v574
    %v577 = vmul.f32 %v563, %v575
    %v578 = vmul.f32 %v564, %v576
    %v579 = vlaneseq
    %v580 = vshrl.u32 %v579, 7
    %v581 = vsub.s32 0, %v580
    %v582 = vrot.slane %v97, %v581
    %v583 = vmul.f32 %v577, %v582
    %v584 = vmul.f32 %v578, %v582
    %v585 = vlaneseq
    %v586 = vshrl.u32 %v585, 7
    %v587 = vsub.s32 0, %v586
    %v588 = vrot.slane %v98, %v587
    %v589 = vadd.f32 %v583, %v588
    %v590 = vadd.f32 %v584, %v588
    %591 = vst [vmem:[#allocation11] sm:$0xff] %v589
    %592 = vst [vmem:[#allocation11 + $0x8] sm:$0xff] %v590
    // Predicated region
    $region46: #{tpu_custom_call.1} parent=1 // pred_check
      _
    $region47: #{tpu_custom_call.1} parent=1 // pred_check_branch
      %594 = sbr.rel (0) target = $region49
    $region48: #{tpu_custom_call.1} parent=1 // pred_region
      %s596 = ssub.s32 256, 256
      %597 = vsyncadd [#allocation4], %s596
      %s598 = sshll.u32 [#allocation11], 4
      %s599 = int_to_ptr.vmem [resolvable:$true] %s598
      %604 = dma.vmem_to_hbm [thread:$0]  %s599, 256, %s6, [#allocation4], 128, 128, 8
    $region49: #{tpu_custom_call.1} parent=1 // pred_fallthru
      _
    // Predicated region
    $region50: #{tpu_custom_call.1} parent=1 // pred_check
      _
    $region51: #{tpu_custom_call.1} parent=1 // pred_check_branch
      %606 = sbr.rel (0) target = $region53
    $region52: #{tpu_custom_call.1} parent=1 // pred_region
      %607 = dma.done [#allocation4], 256
    $region53: #{tpu_custom_call.1} parent=1 // pred_fallthru
      _
    %608 = vsyncpa [#allocation3], 1
    %609 = vsyncpa [#allocation6], 1
    %610 = vsyncpa [#allocation9], 1
    %611 = vsyncpa [#allocation4], 1

</llo_original>
